<compile_context>
chip_gen: v6e
topology: v6e:2x2x1
jax: 0.10.0
libtpu: 0.0.40
codegen_flags: <defaults>
</compile_context>

<pallas_src>
import functools

import jax
import jax.numpy as jnp
from jax.experimental import pallas as pl
from jax.experimental.pallas import tpu as pltpu

SCENES = 4


# ----------------------------------------------------------------------------
# Kernel: one row tile; all scene weights resident, scene chosen per tile.
# ----------------------------------------------------------------------------
def _probe_kernel(tile_sid_ref, x_ref, wS1_ref, bS1_ref, w2_ref, b2_ref, o_ref):
    # tile_sid_ref: SMEM (n_tiles,) int32 -- scene id of this row tile
    # x_ref:   (TM, D)              streamed per tile
    # wS1_ref: (S, D, H)            resident (folded per-scene @ linear1)
    # bS1_ref: (S, 1, H)  f32       resident
    # w2_ref:  (H, O)               resident
    # b2_ref:  (1, O)     f32       resident
    sid = tile_sid_ref[pl.program_id(0)]
    x = x_ref[...]
    w = wS1_ref[sid]                                   # (D, H), dynamic 1st-axis index
    b = bS1_ref[sid]                                   # (1, H)
    h = jnp.dot(x, w, preferred_element_type=jnp.float32) + b
    h = jnp.maximum(h, 0.0)                            # ReLU (f32, VPU)
    o = jnp.dot(h.astype(w2_ref.dtype), w2_ref[...],
                preferred_element_type=jnp.float32) + b2_ref[...]
    o_ref[...] = o.astype(o_ref.dtype)


def _pallas_mlp(tile_sid, x_pad, wS1, bS1, w2, b2, *, tm):
    Mp, D = x_pad.shape
    S, _, H = wS1.shape
    O = w2.shape[1]
    n_tiles = Mp // tm
    return pl.pallas_call(
        _probe_kernel,
        out_shape=jax.ShapeDtypeStruct((Mp, O), jnp.float32),
        grid_spec=pltpu.PrefetchScalarGridSpec(
            num_scalar_prefetch=1,
            grid=(n_tiles,),
            in_specs=[
                pl.BlockSpec((tm, D), lambda i, ts: (i, 0)),       # streamed rows
                pl.BlockSpec((S, D, H), lambda i, ts: (0, 0, 0)),  # resident weights
                pl.BlockSpec((S, 1, H), lambda i, ts: (0, 0, 0)),  # resident bias
                pl.BlockSpec((H, O), lambda i, ts: (0, 0)),        # resident
                pl.BlockSpec((1, O), lambda i, ts: (0, 0)),        # resident
            ],
            out_specs=pl.BlockSpec((tm, O), lambda i, ts: (i, 0)),
        ),
        compiler_params=pltpu.CompilerParams(
            dimension_semantics=("parallel",)),
    )(tile_sid, x_pad, wS1, bS1, w2, b2)


# ----------------------------------------------------------------------------
# Parameters.
# ----------------------------------------------------------------------------
def init_params(key, input_size, hidden_size, output_size):
    ks = jax.random.split(key, 6)
    scale = 0.1
    # nn.Linear weight is (out, in); store transposed so forward does x @ W^T.
    wS = jax.random.normal(ks[0], (SCENES, input_size, input_size), jnp.float32) * scale
    bS = jax.random.normal(ks[1], (SCENES, input_size), jnp.float32) * scale
    w1 = jax.random.normal(ks[2], (hidden_size, input_size), jnp.float32) * scale
    b1 = jax.random.normal(ks[3], (hidden_size,), jnp.float32) * scale
    w2 = jax.random.normal(ks[4], (output_size, hidden_size), jnp.float32) * scale
    b2 = jax.random.normal(ks[5], (output_size,), jnp.float32) * scale
    return {
        "wS_t": jnp.transpose(wS, (0, 2, 1)),   # (S, in, in)
        "bS": bS,                               # (S, in)
        "w1_t": w1.T,                           # (in, hidden)
        "b1": b1,                               # (hidden,)
        "w2_t": w2.T,                           # (hidden, out)
        "b2": b2,                               # (out,)
    }


def fold_params(params, compute_dtype=jnp.float32):
    """Fold linear1 into the per-scene linears (exact composition, done in f32)."""
    wS1 = jnp.einsum("sdk,kh->sdh", params["wS_t"], params["w1_t"])   # (S, D, H) f32
    bS1 = params["bS"] @ params["w1_t"] + params["b1"]                # (S, H)    f32
    return {
        # matmul operands may be bf16 on v6e/v7x; biases stay f32 (VPU adds in f32).
        "wS1": wS1.astype(compute_dtype),
        "bS1": bS1[:, None, :].astype(jnp.float32),                   # (S, 1, H)
        "w2": params["w2_t"].astype(compute_dtype),                   # (H, O)
        "b2": params["b2"][None, :].astype(jnp.float32),              # (1, O)
    }


def _pick_tm(n):
    """Bigger tiles when scenes are large; always leaves >= SCENES tiles."""
    per_scene = max(1, n // SCENES)
    tm = 128
    while tm < 1024 and tm * 2 <= per_scene:
        tm *= 2
    return tm


# ----------------------------------------------------------------------------
# Jitted device-side prep + kernel + un-permute (static shapes throughout).
# ----------------------------------------------------------------------------
@functools.partial(jax.jit, static_argnames=("tm",))
def _forward_grouped(x, sid0, wS1, bS1, w2, b2, *, tm):
    """x: (N, D); sid0: (N,) int32 in [0, SCENES). Returns (N, O), rows in
    scene-grouped order (scene 0 rows first, original order within a scene),
    i.e. exactly the torch.cat(x1, x2, x3, x4) ordering."""
    N, D = x.shape
    S = SCENES

    # Stable sort by scene -> grouped, within-scene order preserved.
    perm = jnp.argsort(sid0, stable=True)
    x_sorted = jnp.take(x, perm, axis=0).astype(wS1.dtype)
    sid_sorted = jnp.take(sid0, perm, axis=0)

    counts = jnp.bincount(sid0, length=S)                    # (S,)
    seg_pad = ((counts + tm - 1) // tm) * tm                  # per-scene padded length
    seg_end = jnp.cumsum(seg_pad)
    seg_off = seg_end - seg_pad                                # padded segment starts
    cum = jnp.cumsum(counts) - counts                          # unpadded segment starts

    # Static upper bound: sum_s ceil(c_s/tm) <= ceil(N/tm) + S - 1.
    n_tiles = (N + tm - 1) // tm + (S - 1)
    Mp = n_tiles * tm

    rank = jnp.arange(N, dtype=jnp.int32) - cum[sid_sorted]
    dest = (seg_off[sid_sorted] + rank).astype(jnp.int32)      # (N,) scatter targets

    x_pad = jnp.zeros((Mp, D), wS1.dtype).at[dest].set(x_sorted)

    # One scene id per row tile (each tile is single-scene by construction).
    tile_start = jnp.arange(n_tiles, dtype=jnp.int32) * tm
    tile_sid = jnp.searchsorted(seg_end, tile_start, side="right")
    tile_sid = jnp.minimum(tile_sid, S - 1).astype(jnp.int32)  # clamp unused slack tiles

    out_pad = _pallas_mlp(tile_sid, x_pad, wS1, bS1, w2, b2, tm=tm)
    return jnp.take(out_pad, dest, axis=0)                     # (N, O)


# ----------------------------------------------------------------------------
# Forward (matches LinearProbe_PerSceneThick.forward semantics).
# ----------------------------------------------------------------------------
def linear_probe_per_scene_thick(x, scene_sign, params, folded=None, tm=None):
    """x: (N, D) f32; scene_sign: (N,) int in {1..4} (other values dropped).
    Returns (M, output_size): scene-1 rows, then scene-2, ... (original order
    preserved within each scene), exactly as the torch module's cat."""
    if folded is None:
        folded = fold_params(params)
    x = jnp.asarray(x, jnp.float32)
    scene_sign = jnp.asarray(scene_sign, jnp.int32)

    O = folded["w2"].shape[1]
    valid = (scene_sign >= 1) & (scene_sign <= SCENES)
    if not bool(jnp.all(valid)):
        # Rare path: torch boolean indexing silently drops out-of-range scenes;
        # dynamic output shape forces this one eager filter.
        x = x[valid]
        scene_sign = scene_sign[valid]
    n = int(x.shape[0])
    if n == 0:
        return jnp.zeros((0, O), jnp.float32)
    if tm is None:
        tm = _pick_tm(n)
    return _forward_grouped(x, scene_sign - 1,
                            folded["wS1"], folded["bS1"],
                            folded["w2"], folded["b2"], tm=tm)


# ----------------------------------------------------------------------------
# Pure-JAX reference (unfused, mirrors the PyTorch module exactly).
# ----------------------------------------------------------------------------
def reference_forward(x, scene_sign, params):
    parts = []
    for s in range(SCENES):
        xs = x[scene_sign == (s + 1)]
        parts.append(xs @ params["wS_t"][s] + params["bS"][s])
    y = jnp.concatenate(parts, axis=0)
    h = jnp.maximum(y @ params["w1_t"] + params["b1"], 0.0)
    return h @ params["w2_t"] + params["b2"]


if __name__ == "__main__":
    input_size, hidden_size, output_size = 32, 32, 16
    N = 512

    key = jax.random.PRNGKey(0)
    k_x, k_s, k_p = jax.random.split(key, 3)
    x = jax.random.normal(k_x, (N, input_size), jnp.float32)
    scene_sign = jax.random.randint(k_s, (N,), 1, SCENES + 1).astype(jnp.int32)

    params = init_params(k_p, input_size, hidden_size, output_size)
    # Default compute_dtype=f32 keeps the 1e-4 check tight; pass
    # compute_dtype=jnp.bfloat16 on v6e/v7x to halve streamed-x / weight DMA.
    folded = fold_params(params)

    out = linear_probe_per_scene_thick(x, scene_sign, params, folded=folded)
    out = jax.block_until_ready(out)

    ref = reference_forward(x, scene_sign, params)
    assert out.shape == ref.shape, (out.shape, ref.shape)
    err = float(jnp.max(jnp.abs(out - ref)))
    assert jnp.allclose(out, ref, atol=1e-4, rtol=1e-4), err

    print("KERNEL_OK")
</pallas_src>

<mosaic_0001>
module attributes {stable_mosaic.version = 11 : i64} {
  func.func private @main(%arg0: i32) attributes {dimension_semantics = [#tpu.dimension_semantics<core_parallel>], iteration_bounds = array<i64: 2>, tpu.core_type = #tpu.core_type<sc_scalar_subcore>, window_params = []} {
    return
  }
}

module attributes {stable_mosaic.version = 11 : i64} {
  func.func private @main(%arg0: i32) attributes {dimension_semantics = [#tpu.dimension_semantics<core_parallel>], iteration_bounds = array<i64: 2>, tpu.core_type = #tpu.core_type<sc_scalar_subcore>, window_params = []} {
    return
  }
}

module attributes {stable_mosaic.version = 11 : i64} {
  func.func @_probe_kernel(%arg0: i32, %arg1: memref<7xi32, #tpu.memory_space<smem>>, %arg2: memref<128x32xf32, #tpu.memory_space<vmem>>, %arg3: memref<4x32x32xf32, #tpu.memory_space<vmem>>, %arg4: memref<4x1x32xf32, #tpu.memory_space<vmem>>, %arg5: memref<32x16xf32, #tpu.memory_space<vmem>>, %arg6: memref<1x16xf32, #tpu.memory_space<vmem>>, %arg7: memref<128x16xf32, #tpu.memory_space<vmem>>) attributes {dimension_semantics = [#tpu.dimension_semantics<parallel>], iteration_bounds = array<i64: 7>, scalar_prefetch = 1 : i64, scratch_operands = 0 : i64, tpu.core_type = #tpu.core_type<tc>, window_params = [{transform_indices = @transform_0, window_bounds = array<i64: 128, 32>}, {pipeline_mode = #tpu.pipeline_mode<synchronous>, transform_indices = @transform_1, window_bounds = array<i64: 4, 32, 32>}, {pipeline_mode = #tpu.pipeline_mode<synchronous>, transform_indices = @transform_2, window_bounds = array<i64: 4, 1, 32>}, {pipeline_mode = #tpu.pipeline_mode<synchronous>, transform_indices = @transform_3, window_bounds = array<i64: 32, 16>}, {pipeline_mode = #tpu.pipeline_mode<synchronous>, transform_indices = @transform_4, window_bounds = array<i64: 1, 16>}, {transform_indices = @transform_5, window_bounds = array<i64: 128, 16>}]} {
    %0 = arith.index_cast %arg0 : i32 to index
    %1 = memref.load %arg1[%0] : memref<7xi32, #tpu.memory_space<smem>>
    %c0 = arith.constant 0 : index
    %c0_0 = arith.constant 0 : index
    %2 = vector.load %arg2[%c0, %c0_0] : memref<128x32xf32, #tpu.memory_space<vmem>>, vector<128x32xf32>
    %3 = arith.index_cast %1 : i32 to index
    %c0_1 = arith.constant 0 : index
    %c0_2 = arith.constant 0 : index
    %4 = vector.load %arg3[%3, %c0_1, %c0_2] : memref<4x32x32xf32, #tpu.memory_space<vmem>>, vector<1x32x32xf32>
    %5 = vector.shape_cast %4 : vector<1x32x32xf32> to vector<32x32xf32>
    %6 = arith.index_cast %1 : i32 to index
    %c0_3 = arith.constant 0 : index
    %c0_4 = arith.constant 0 : index
    %7 = vector.load %arg4[%6, %c0_3, %c0_4] : memref<4x1x32xf32, #tpu.memory_space<vmem>>, vector<1x1x32xf32>
    %8 = vector.shape_cast %7 : vector<1x1x32xf32> to vector<1x32xf32>
    %cst = arith.constant dense<0.000000e+00> : vector<128x32xf32>
    %9 = tpu.matmul %2, %5, %cst {dimension_numbers = #tpu.dot_dimension_numbers<[1], [0], [0], [1], [0, 0, 1, 1], [], []>} : vector<128x32xf32>, vector<32x32xf32>, vector<128x32xf32> -> vector<128x32xf32>
    %10 = vector.broadcast %8 : vector<1x32xf32> to vector<128x32xf32>
    %11 = arith.addf %9, %10 : vector<128x32xf32>
    %cst_5 = arith.constant 0.000000e+00 : f32
    %12 = vector.broadcast %cst_5 : f32 to vector<128x32xf32>
    %13 = arith.maximumf %11, %12 : vector<128x32xf32>
    %c0_6 = arith.constant 0 : index
    %c0_7 = arith.constant 0 : index
    %14 = vector.load %arg5[%c0_6, %c0_7] : memref<32x16xf32, #tpu.memory_space<vmem>>, vector<32x16xf32>
    %cst_8 = arith.constant dense<0.000000e+00> : vector<128x16xf32>
    %15 = tpu.matmul %13, %14, %cst_8 {dimension_numbers = #tpu.dot_dimension_numbers<[1], [0], [0], [1], [0, 0, 1, 1], [], []>} : vector<128x32xf32>, vector<32x16xf32>, vector<128x16xf32> -> vector<128x16xf32>
    %c0_9 = arith.constant 0 : index
    %c0_10 = arith.constant 0 : index
    %16 = vector.load %arg6[%c0_9, %c0_10] : memref<1x16xf32, #tpu.memory_space<vmem>>, vector<1x16xf32>
    %17 = vector.broadcast %16 : vector<1x16xf32> to vector<128x16xf32>
    %18 = arith.addf %15, %17 : vector<128x16xf32>
    %c0_11 = arith.constant 0 : index
    %c0_12 = arith.constant 0 : index
    %19 = vector.load %arg7[%c0_11, %c0_12] : memref<128x16xf32, #tpu.memory_space<vmem>>, vector<128x16xf32>
    tpu.vector_store %arg7[%c0_11, %c0_12], %18 {strides = array<i32>} : memref<128x16xf32, #tpu.memory_space<vmem>>, vector<128x16xf32>,
    return
  }
  func.func @transform_0(%arg0: i32, %arg1: memref<7xi32, #tpu.memory_space<smem>>) -> (i32, i32) {
    %c0_i32 = arith.constant 0 : i32
    %c0_i32_0 = arith.constant 0 : i32
    return %arg0, %c0_i32 : i32, i32
  }
  func.func @transform_1(%arg0: i32, %arg1: memref<7xi32, #tpu.memory_space<smem>>) -> (i32, i32, i32) {
    %c0_i32 = arith.constant 0 : i32
    %c0_i32_0 = arith.constant 0 : i32
    %c0_i32_1 = arith.constant 0 : i32
    %c0_i32_2 = arith.constant 0 : i32
    return %c0_i32, %c0_i32_0, %c0_i32_1 : i32, i32, i32
  }
  func.func @transform_2(%arg0: i32, %arg1: memref<7xi32, #tpu.memory_space<smem>>) -> (i32, i32, i32) {
    %c0_i32 = arith.constant 0 : i32
    %c0_i32_0 = arith.constant 0 : i32
    %c0_i32_1 = arith.constant 0 : i32
    %c0_i32_2 = arith.constant 0 : i32
    return %c0_i32, %c0_i32_0, %c0_i32_1 : i32, i32, i32
  }
  func.func @transform_3(%arg0: i32, %arg1: memref<7xi32, #tpu.memory_space<smem>>) -> (i32, i32) {
    %c0_i32 = arith.constant 0 : i32
    %c0_i32_0 = arith.constant 0 : i32
    %c0_i32_1 = arith.constant 0 : i32
    return %c0_i32, %c0_i32_0 : i32, i32
  }
  func.func @transform_4(%arg0: i32, %arg1: memref<7xi32, #tpu.memory_space<smem>>) -> (i32, i32) {
    %c0_i32 = arith.constant 0 : i32
    %c0_i32_0 = arith.constant 0 : i32
    %c0_i32_1 = arith.constant 0 : i32
    return %c0_i32, %c0_i32_0 : i32, i32
  }
  func.func @transform_5(%arg0: i32, %arg1: memref<7xi32, #tpu.memory_space<smem>>) -> (i32, i32) {
    %c0_i32 = arith.constant 0 : i32
    %c0_i32_0 = arith.constant 0 : i32
    return %arg0, %c0_i32 : i32, i32
  }
}

</mosaic_0001>

<llo_original>
// kernel: custom-call
$region0: #{custom-call}
  %s0 = inlined_call_operand.vmem [shape: u32[7], index: 0, kind: output, shape index: {}]

// kernel: _forward_grouped.1
$region0: #{_forward_grouped.1}
  #allocation0 [shape = 'u32[]', space=smem, size = 0x4, offset = 0x4, fixed_abs, tag = 'smem constant byte address 0x4 - core index']
  #allocation1 [shape = 'u32[144,128]{1,0:T(1,128)}', space=vmem, size = 0x12000, scoped, tag = 'internal scratch']
  #allocation2 [shape = 's32[1]{0}', space=sflag, size = 0x4, scoped, tag = 'scoped memory for _forward_grouped.1']
  #allocation3 [shape = 'u8[512]{0}', space=smem, size = 0x200, scoped, tag = 'prefetched SMEM operand 0']
  %s0 = inlined_call_operand.vmem [shape: s32[7], index: 0, kind: input, shape index: {}]
  %s1 = inlined_call_operand.vmem [shape: f32[896,32], index: 1, kind: input, shape index: {}]
  %s2 = inlined_call_operand.vmem [shape: f32[4,32,32], index: 2, kind: input, shape index: {}]
  %s3 = inlined_call_operand.vmem [shape: f32[4,1,32], index: 3, kind: input, shape index: {}]
  %s4 = inlined_call_operand.vmem [shape: f32[32,16], index: 4, kind: input, shape index: {}]
  %s5 = inlined_call_operand.vmem [shape: f32[1,16], index: 5, kind: input, shape index: {}]
  %s6 = inlined_call_operand.vmem [shape: f32[896,16], index: 6, kind: output, shape index: {}]
  %s7 = sld [smem:[#allocation0]]
  $region53: #{_forward_grouped.1} parent=0
    _
  %s9 = ssub.s32 1, %s7
  %s10 = scalar_select 0, %s9, %s7
  %s11 = sshll.u32 %s0, 4
  %s12 = int_to_ptr.vmem [resolvable:$true] %s11
  %14 = dma.vmem_to_smem %s12, 16, [#allocation3], [#allocation2]
  %15 = dma.done [#allocation2], 16
  %16 = sfence
  loop: start=0, step=1, limit=9
  $region2: #{_forward_grouped.1} parent=0 // loop_pre_header
    _
  $region3: #{_forward_grouped.1} parent=0 // loop_header
    %s18 = sphi 0, %s22
    %p19 = scmp.ge.s32.totalorder %s18, 9
    %s28 = sphi 0, %s30
    %s31 = sphi 0, %s28
    %s32 = sphi 0, %s31
    %s48 = sphi 0, %s32
    %s52 = sphi 0, %s52
    %s54 = sphi 0, %s52
    %s55 = sphi 0, %s54
    %s69 = sphi 0, %s55
    %s73 = sphi 0, %s73
    %s75 = sphi 0, %s73
    %s76 = sphi 0, %s75
    %s90 = sphi 0, %s76
    %s94 = sphi 0, %s94
    %s96 = sphi 0, %s94
    %s97 = sphi 0, %s96
    %s111 = sphi 0, %s97
    %s115 = sphi 0, %s115
    %s117 = sphi 0, %s115
    %s118 = sphi 0, %s117
    %s132 = sphi 0, %s118
    %s138 = sphi 0, %s140
    %s141 = sphi 0, %s138
    %s142 = sphi 0, %s141
    %s158 = sphi 0, %s142
  $region4: #{_forward_grouped.1} parent=0 // loop_header_branch
    %21 = sbr.rel (%p19) target = $region8
  $region5: #{_forward_grouped.1} parent=0 // loop_body
    %s23 = ssub.s32 %s18, 1
    %s24 = ssub.s32 %s18, 2
    %s25 = sadd.s32 %s18, 1
    %s26 = ssub.s32 %s18, %s25
    %p27 = scmp.eq.s32.totalorder %s26, 0
    %s29 = sadd.s32 %s28, 1
    %s30 = scalar_select %p27, %s28, %s29
    %p33 = pneg %p27
    %p34 = scmp.eq.s32.totalorder %s18, 6
    %p35 = por %p33, %p34
    %p36 = scmp.ne.s32.totalorder %s28, %s31
    %p37 = scmp.eq.s32.totalorder %s18, 0
    %p38 = por %p36, %p37
    %p39 = scmp.ne.s32.totalorder %s28, %s31
    %p40 = scmp.eq.s32.totalorder %s23, 6
    %p41 = por %p39, %p40
    %p42 = scmp.ne.s32.totalorder %s31, %s32
    %p43 = scmp.eq.s32.totalorder %s23, 0
    %p44 = por %p42, %p43
    %p45 = scmp.ne.s32.totalorder %s31, %s32
    %p46 = scmp.eq.s32.totalorder %s24, 6
    %p47 = por %p45, %p46
    %p49 = scmp.ne.s32.totalorder %s32, %s48
    %p50 = scmp.eq.s32.totalorder %s24, 0
    %p51 = por %p49, %p50
    %s53 = sadd.s32 %s52, 1
    %p56 = scmp.eq.s32.totalorder %s18, 6
    %p57 = scmp.ne.s32.totalorder %s52, %s54
    %p58 = scmp.eq.s32.totalorder %s18, 0
    %p59 = por %p57, %p58
    %p60 = scmp.ne.s32.totalorder %s52, %s54
    %p61 = scmp.eq.s32.totalorder %s23, 6
    %p62 = por %p60, %p61
    %p63 = scmp.ne.s32.totalorder %s54, %s55
    %p64 = scmp.eq.s32.totalorder %s23, 0
    %p65 = por %p63, %p64
    %p66 = scmp.ne.s32.totalorder %s54, %s55
    %p67 = scmp.eq.s32.totalorder %s24, 6
    %p68 = por %p66, %p67
    %p70 = scmp.ne.s32.totalorder %s55, %s69
    %p71 = scmp.eq.s32.totalorder %s24, 0
    %p72 = por %p70, %p71
    %s74 = sadd.s32 %s73, 1
    %p77 = scmp.eq.s32.totalorder %s18, 6
    %p78 = scmp.ne.s32.totalorder %s73, %s75
    %p79 = scmp.eq.s32.totalorder %s18, 0
    %p80 = por %p78, %p79
    %p81 = scmp.ne.s32.totalorder %s73, %s75
    %p82 = scmp.eq.s32.totalorder %s23, 6
    %p83 = por %p81, %p82
    %p84 = scmp.ne.s32.totalorder %s75, %s76
    %p85 = scmp.eq.s32.totalorder %s23, 0
    %p86 = por %p84, %p85
    %p87 = scmp.ne.s32.totalorder %s75, %s76
    %p88 = scmp.eq.s32.totalorder %s24, 6
    %p89 = por %p87, %p88
    %p91 = scmp.ne.s32.totalorder %s76, %s90
    %p92 = scmp.eq.s32.totalorder %s24, 0
    %p93 = por %p91, %p92
    %s95 = sadd.s32 %s94, 1
    %p98 = scmp.eq.s32.totalorder %s18, 6
    %p99 = scmp.ne.s32.totalorder %s94, %s96
    %p100 = scmp.eq.s32.totalorder %s18, 0
    %p101 = por %p99, %p100
    %p102 = scmp.ne.s32.totalorder %s94, %s96
    %p103 = scmp.eq.s32.totalorder %s23, 6
    %p104 = por %p102, %p103
    %p105 = scmp.ne.s32.totalorder %s96, %s97
    %p106 = scmp.eq.s32.totalorder %s23, 0
    %p107 = por %p105, %p106
    %p108 = scmp.ne.s32.totalorder %s96, %s97
    %p109 = scmp.eq.s32.totalorder %s24, 6
    %p110 = por %p108, %p109
    %p112 = scmp.ne.s32.totalorder %s97, %s111
    %p113 = scmp.eq.s32.totalorder %s24, 0
    %p114 = por %p112, %p113
    %s116 = sadd.s32 %s115, 1
    %p119 = scmp.eq.s32.totalorder %s18, 6
    %p120 = scmp.ne.s32.totalorder %s115, %s117
    %p121 = scmp.eq.s32.totalorder %s18, 0
    %p122 = por %p120, %p121
    %p123 = scmp.ne.s32.totalorder %s115, %s117
    %p124 = scmp.eq.s32.totalorder %s23, 6
    %p125 = por %p123, %p124
    %p126 = scmp.ne.s32.totalorder %s117, %s118
    %p127 = scmp.eq.s32.totalorder %s23, 0
    %p128 = por %p126, %p127
    %p129 = scmp.ne.s32.totalorder %s117, %s118
    %p130 = scmp.eq.s32.totalorder %s24, 6
    %p131 = por %p129, %p130
    %p133 = scmp.ne.s32.totalorder %s118, %s132
    %p134 = scmp.eq.s32.totalorder %s24, 0
    %p135 = por %p133, %p134
    %s136 = ssub.s32 %s18, %s25
    %p137 = scmp.eq.s32.totalorder %s136, 0
    %s139 = sadd.s32 %s138, 1
    %s140 = scalar_select %p137, %s138, %s139
    %p143 = pneg %p137
    %p144 = scmp.eq.s32.totalorder %s18, 6
    %p145 = por %p143, %p144
    %p146 = scmp.ne.s32.totalorder %s138, %s141
    %p147 = scmp.eq.s32.totalorder %s18, 0
    %p148 = por %p146, %p147
    %p149 = scmp.ne.s32.totalorder %s138, %s141
    %p150 = scmp.eq.s32.totalorder %s23, 6
    %p151 = por %p149, %p150
    %p152 = scmp.ne.s32.totalorder %s141, %s142
    %p153 = scmp.eq.s32.totalorder %s23, 0
    %p154 = por %p152, %p153
    %p155 = scmp.ne.s32.totalorder %s141, %s142
    %p156 = scmp.eq.s32.totalorder %s24, 6
    %p157 = por %p155, %p156
    %p159 = scmp.ne.s32.totalorder %s142, %s158
    %p160 = scmp.eq.s32.totalorder %s24, 0
    %p161 = por %p159, %p160
    %p162 = scmp.le.s32.totalorder 1, %s18
    %p163 = scmp.lt.s32.totalorder %s18, 8
    %p164 = pnand %p162, %p163
    %p165 = pneg %p164
    // Predicated region
    $region9: #{_forward_grouped.1} parent=5 // pred_check
      _
    $region10: #{_forward_grouped.1} parent=5 // pred_check_branch
      %167 = sbr.rel (%p164) target = $region12
    $region11: #{_forward_grouped.1} parent=5 // pred_region
      %s168 = ssub.s32 %s18, 1
      // Predicated region
      $region13: #{_forward_grouped.1} parent=11 // pred_check
        %p169 = pneg %p65
      $region14: #{_forward_grouped.1} parent=11 // pred_check_branch
        %171 = sbr.rel (%p169) target = $region16
      $region15: #{_forward_grouped.1} parent=11 // pred_region
        _
      $region16: #{_forward_grouped.1} parent=11 // pred_fallthru
        _
      // Predicated region
      $region17: #{_forward_grouped.1} parent=11 // pred_check
        %p172 = pneg %p86
      $region18: #{_forward_grouped.1} parent=11 // pred_check_branch
        %174 = sbr.rel (%p172) target = $region20
      $region19: #{_forward_grouped.1} parent=11 // pred_region
        _
      $region20: #{_forward_grouped.1} parent=11 // pred_fallthru
        _
      // Predicated region
      $region21: #{_forward_grouped.1} parent=11 // pred_check
        %p175 = pneg %p107
      $region22: #{_forward_grouped.1} parent=11 // pred_check_branch
        %177 = sbr.rel (%p175) target = $region24
      $region23: #{_forward_grouped.1} parent=11 // pred_region
        _
      $region24: #{_forward_grouped.1} parent=11 // pred_fallthru
        _
      // Predicated region
      $region25: #{_forward_grouped.1} parent=11 // pred_check
        %p178 = pneg %p128
      $region26: #{_forward_grouped.1} parent=11 // pred_check_branch
        %180 = sbr.rel (%p178) target = $region28
      $region27: #{_forward_grouped.1} parent=11 // pred_region
        _
      $region28: #{_forward_grouped.1} parent=11 // pred_fallthru
        _
    $region12: #{_forward_grouped.1} parent=5 // pred_fallthru
      _
    %p181 = scmp.lt.s32.totalorder %s18, 7
    // Predicated region
    $region29: #{_forward_grouped.1} parent=5 // pred_check
      %p182 = pneg %p181
    $region30: #{_forward_grouped.1} parent=5 // pred_check_branch
      %184 = sbr.rel (%p182) target = $region32
    $region31: #{_forward_grouped.1} parent=5 // pred_region
      // Predicated region
      $region33: #{_forward_grouped.1} parent=31 // pred_check
        %p185 = pneg %p38
      $region34: #{_forward_grouped.1} parent=31 // pred_check_branch
        %187 = sbr.rel (%p185) target = $region36
      $region35: #{_forward_grouped.1} parent=31 // pred_region
        %s188 = smul.u32 16, %s18
        %p189 = scmp.lt.s32.totalorder %s188, 111
        %s190 = scalar_select %p189, %s188, 111
        %s191 = smul.addr %s190, 8
        %s192 = scalar_lea.vmem %s1, %s191
        %s193 = smul.u32 16, %s18
      $region36: #{_forward_grouped.1} parent=31 // pred_fallthru
        _
    $region32: #{_forward_grouped.1} parent=5 // pred_fallthru
      _
    %p194 = scmp.le.s32.totalorder 1, %s18
    %p195 = scmp.lt.s32.totalorder %s18, 8
    %p196 = pnand %p194, %p195
    %p197 = pneg %p196
    // Predicated region
    $region37: #{_forward_grouped.1} parent=5 // pred_check
      _
    $region38: #{_forward_grouped.1} parent=5 // pred_check_branch
      %199 = sbr.rel (%p196) target = $region40
    $region39: #{_forward_grouped.1} parent=5 // pred_region
      %s200 = ssub.s32 %s18, 1
      %s201 = smul.u32 16, %s23
      %p202 = scmp.lt.s32.totalorder %s201, 111
      %s203 = scalar_select %p202, %s201, 111
      %s204 = smul.addr %s203, 8
      %s205 = scalar_lea.vmem %s1, %s204
      %p206 = pneg %p44
      %p207 = pneg %p41
      %p208 = pneg %p65
      %p209 = pneg %p62
      %p210 = pneg %p86
      %p211 = pneg %p83
      %p212 = pneg %p107
      %p213 = pneg %p104
      %p214 = pneg %p128
      %p215 = pneg %p125
      %p216 = pneg %p154
      %p217 = pneg %p151
      %s218 = smul.u32 16, %s23
      %p219 = scmp.lt.s32.totalorder %s218, 111
      %s220 = scalar_select %p219, %s218, 111
      %s221 = smul.addr %s220, 8
      %s222 = scalar_lea.vmem %s6, %s221
      %s223 = smul.u32 16, %s23
      %p224 = scmp.lt.s32.totalorder %s223, 111
      %s225 = scalar_select %p224, %s223, 111
      %s226 = smul.addr %s225, 8
      %s227 = scalar_lea.vmem %s1, %s226
      %s228 = smul.u32 16, %s23
      %s229 = smul.u32 16, %s23
      %p230 = scmp.lt.s32.totalorder %s229, 111
      %s231 = scalar_select %p230, %s229, 111
      %s232 = smul.addr %s231, 8
      %s233 = scalar_lea.vmem %s6, %s232
      %s234 = smul.u32 16, %s23
      %s235 = sld [smem:[#allocation3 + %s23]]
      %v236 = vld [vmem:[%s227] sm:$0xff]
      %v237 = vld [vmem:[%s227 + $0x8] sm:$0xff]
      %v238 = vld [vmem:[%s227 + $0x10] sm:$0xff]
      %v239 = vld [vmem:[%s227 + $0x18] sm:$0xff]
      %v240 = vld [vmem:[%s227 + $0x20] sm:$0xff]
      %v241 = vld [vmem:[%s227 + $0x28] sm:$0xff]
      %v242 = vld [vmem:[%s227 + $0x30] sm:$0xff]
      %v243 = vld [vmem:[%s227 + $0x38] sm:$0xff]
      %v244 = vld [vmem:[%s227 + $0x40] sm:$0xff]
      %v245 = vld [vmem:[%s227 + $0x48] sm:$0xff]
      %v246 = vld [vmem:[%s227 + $0x50] sm:$0xff]
      %v247 = vld [vmem:[%s227 + $0x58] sm:$0xff]
      %v248 = vld [vmem:[%s227 + $0x60] sm:$0xff]
      %v249 = vld [vmem:[%s227 + $0x68] sm:$0xff]
      %v250 = vld [vmem:[%s227 + $0x70] sm:$0xff]
      %v251 = vld [vmem:[%s227 + $0x78] sm:$0xff]
      %s252 = smul.u32 %s235, 32
      %s253 = scalar_lea.vmem %s2, %s252
      %v254 = vld [vmem:[%s253] sm:$0xff]
      %v255 = vld [vmem:[%s253 + $0x8] sm:$0xff]
      %v256 = vld [vmem:[%s253 + $0x10] sm:$0xff]
      %v257 = vld [vmem:[%s253 + $0x18] sm:$0xff]
      %s258 = scalar_lea.vmem %s3, %s235
      %v259 = vld [vmem:[%s258] sm:$0x1]
      %v261 = vlaneseq
      %v262 = vshrl.u32 %v261, 7
      %v263 = vsub.s32 0, %v262
      %v264 = vrot.slane %v259, %v263
      %vm266 = vcmask 261120
      %v268 = vsel %vm266, %v236, 0
      %v271 = vsel %vm266, %v237, 0
      %v274 = vsel %vm266, %v238, 0
      %v277 = vsel %vm266, %v239, 0
      %v280 = vsel %vm266, %v240, 0
      %v283 = vsel %vm266, %v241, 0
      %v286 = vsel %vm266, %v242, 0
      %v289 = vsel %vm266, %v243, 0
      %v292 = vsel %vm266, %v244, 0
      %v295 = vsel %vm266, %v245, 0
      %v298 = vsel %vm266, %v246, 0
      %v301 = vsel %vm266, %v247, 0
      %v304 = vsel %vm266, %v248, 0
      %v307 = vsel %vm266, %v249, 0
      %v310 = vsel %vm266, %v250, 0
      %v313 = vsel %vm266, %v251, 0
      %315 = vmatprep.subr.mxu0 0.0
      %316 = vmatpush1.msra.mxu0 0.0
      %317 = vmatprep.subr.mxu0 0.0
      %318 = vmatpush1.msra.mxu0 0.0
      %319 = vmatprep.subr.mxu0 0.0
      %320 = vmatpush1.msra.mxu0 0.0
      %321 = vmatprep.subr.mxu0 0.0
      %322 = vmatpush1.msra.mxu0 0.0
      %323 = vmatprep.subr.mxu0 0.0
      %324 = vmatpush1.msra.mxu0 0.0
      %325 = vmatprep.subr.mxu0 0.0
      %326 = vmatpush1.msra.mxu0 0.0
      %327 = vmatprep.subr.mxu0 0.0
      %328 = vmatpush1.msra.mxu0 0.0
      %329 = vmatprep.subr.mxu0 0.0
      %330 = vmatpush1.msra.mxu0 0.0
      %331 = vmatprep.subr.mxu0 0.0
      %332 = vmatpush1.msra.mxu0 0.0
      %333 = vmatprep.subr.mxu0 0.0
      %334 = vmatpush1.msra.mxu0 0.0
      %335 = vmatprep.subr.mxu0 0.0
      %336 = vmatpush1.msra.mxu0 0.0
      %337 = vmatprep.subr.mxu0 0.0
      %338 = vmatpush1.msra.mxu0 0.0
      %339 = vmatprep.subr.mxu0 0.0
      %340 = vmatpush1.msra.mxu0 %v257
      %341 = vmatprep.subr.mxu0 0.0
      %342 = vmatpush1.msra.mxu0 %v256
      %343 = vmatprep.subr.mxu0 0.0
      %344 = vmatpush1.msra.mxu0 %v255
      %345 = vmatprep.subr.mxu0 0.0
      %346 = vmatpush1.msra.mxu0 %v254
      %347 = vmatprep.subr.mxu0 0.0
      %348 = vmatpush2.msra.mxu0 0.0
      %349 = vmatprep.subr.mxu0 0.0
      %350 = vmatpush2.msra.mxu0 0.0
      %351 = vmatprep.subr.mxu0 0.0
      %352 = vmatpush2.msra.mxu0 0.0
      %353 = vmatprep.subr.mxu0 0.0
      %354 = vmatpush2.msra.mxu0 0.0
      %355 = vmatprep.subr.mxu0 0.0
      %356 = vmatpush2.msra.mxu0 0.0
      %357 = vmatprep.subr.mxu0 0.0
      %358 = vmatpush2.msra.mxu0 0.0
      %359 = vmatprep.subr.mxu0 0.0
      %360 = vmatpush2.msra.mxu0 0.0
      %361 = vmatprep.subr.mxu0 0.0
      %362 = vmatpush2.msra.mxu0 0.0
      %363 = vmatprep.subr.mxu0 0.0
      %364 = vmatpush2.msra.mxu0 0.0
      %365 = vmatprep.subr.mxu0 0.0
      %366 = vmatpush2.msra.mxu0 0.0
      %367 = vmatprep.subr.mxu0 0.0
      %368 = vmatpush2.msra.mxu0 0.0
      %369 = vmatprep.subr.mxu0 0.0
      %370 = vmatpush2.msra.mxu0 0.0
      %371 = vmatprep.subr.mxu0 0.0
      %372 = vmatpush2.msra.mxu0 0.0
      %373 = vmatprep.subr.mxu0 0.0
      %374 = vmatpush2.msra.mxu0 0.0
      %375 = vmatprep.subr.mxu0 0.0
      %376 = vmatpush2.msra.mxu0 0.0
      %377 = vmatprep.subr.mxu0 0.0
      %378 = vmatpush2.msra.mxu0 0.0
      %379 = vmatprep.mubr.f32.mxu0 0.0
      %380 = vmatmul.mubr.f32.gmra.mxu0 %v268
      %v381 = vpop.f32.mrf.mxu0
      %v382 = vadd.f32 %v264, %v381
      %v383 = vpop.f32.mrf.mxu0
      %384 = vmatprep.mubr.f32.mxu0 0.0
      %385 = vmatmul.mubr.f32.gmra.mxu0 %v271
      %v386 = vpop.f32.mrf.mxu0
      %v387 = vadd.f32 %v264, %v386
      %v388 = vpop.f32.mrf.mxu0
      %389 = vmatprep.mubr.f32.mxu0 0.0
      %390 = vmatmul.mubr.f32.gmra.mxu0 %v274
      %v391 = vpop.f32.mrf.mxu0
      %v392 = vadd.f32 %v264, %v391
      %v393 = vpop.f32.mrf.mxu0
      %394 = vmatprep.mubr.f32.mxu0 0.0
      %395 = vmatmul.mubr.f32.gmra.mxu0 %v277
      %v396 = vpop.f32.mrf.mxu0
      %v397 = vadd.f32 %v264, %v396
      %v398 = vpop.f32.mrf.mxu0
      %399 = vmatprep.mubr.f32.mxu0 0.0
      %400 = vmatmul.mubr.f32.gmra.mxu0 %v280
      %v401 = vpop.f32.mrf.mxu0
      %v402 = vadd.f32 %v264, %v401
      %v403 = vpop.f32.mrf.mxu0
      %404 = vmatprep.mubr.f32.mxu0 0.0
      %405 = vmatmul.mubr.f32.gmra.mxu0 %v283
      %v406 = vpop.f32.mrf.mxu0
      %v407 = vadd.f32 %v264, %v406
      %v408 = vpop.f32.mrf.mxu0
      %409 = vmatprep.mubr.f32.mxu0 0.0
      %410 = vmatmul.mubr.f32.gmra.mxu0 %v286
      %v411 = vpop.f32.mrf.mxu0
      %v412 = vadd.f32 %v264, %v411
      %v413 = vpop.f32.mrf.mxu0
      %414 = vmatprep.mubr.f32.mxu0 0.0
      %415 = vmatmul.mubr.f32.gmra.mxu0 %v289
      %v416 = vpop.f32.mrf.mxu0
      %v417 = vadd.f32 %v264, %v416
      %v418 = vpop.f32.mrf.mxu0
      %419 = vmatprep.mubr.f32.mxu0 0.0
      %420 = vmatmul.mubr.f32.gmra.mxu0 %v292
      %v421 = vpop.f32.mrf.mxu0
      %v422 = vadd.f32 %v264, %v421
      %v423 = vpop.f32.mrf.mxu0
      %424 = vmatprep.mubr.f32.mxu0 0.0
      %425 = vmatmul.mubr.f32.gmra.mxu0 %v295
      %v426 = vpop.f32.mrf.mxu0
      %v427 = vadd.f32 %v264, %v426
      %v428 = vpop.f32.mrf.mxu0
      %429 = vmatprep.mubr.f32.mxu0 0.0
      %430 = vmatmul.mubr.f32.gmra.mxu0 %v298
      %v431 = vpop.f32.mrf.mxu0
      %v432 = vadd.f32 %v264, %v431
      %v433 = vpop.f32.mrf.mxu0
      %434 = vmatprep.mubr.f32.mxu0 0.0
      %435 = vmatmul.mubr.f32.gmra.mxu0 %v301
      %v436 = vpop.f32.mrf.mxu0
      %v437 = vadd.f32 %v264, %v436
      %v438 = vpop.f32.mrf.mxu0
      %439 = vmatprep.mubr.f32.mxu0 0.0
      %440 = vmatmul.mubr.f32.gmra.mxu0 %v304
      %v441 = vpop.f32.mrf.mxu0
      %v442 = vadd.f32 %v264, %v441
      %v443 = vpop.f32.mrf.mxu0
      %444 = vmatprep.mubr.f32.mxu0 0.0
      %445 = vmatmul.mubr.f32.gmra.mxu0 %v307
      %v446 = vpop.f32.mrf.mxu0
      %v447 = vadd.f32 %v264, %v446
      %v448 = vpop.f32.mrf.mxu0
      %449 = vmatprep.mubr.f32.mxu0 0.0
      %450 = vmatmul.mubr.f32.gmra.mxu0 %v310
      %v451 = vpop.f32.mrf.mxu0
      %v452 = vadd.f32 %v264, %v451
      %v453 = vpop.f32.mrf.mxu0
      %454 = vmatprep.mubr.f32.mxu0 0.0
      %455 = vmatmul.mubr.f32.gmra.mxu0 %v313
      %v456 = vpop.f32.mrf.mxu0
      %v457 = vadd.f32 %v264, %v456
      %v458 = vpop.f32.mrf.mxu0
      %459 = vdwg.mxu0
      %v460 = vmax.f32 %v382, 0.0
      %v461 = vmax.f32 %v387, 0.0
      %v462 = vmax.f32 %v392, 0.0
      %v463 = vmax.f32 %v397, 0.0
      %v464 = vmax.f32 %v402, 0.0
      %v465 = vmax.f32 %v407, 0.0
      %v466 = vmax.f32 %v412, 0.0
      %v467 = vmax.f32 %v417, 0.0
      %v468 = vmax.f32 %v422, 0.0
      %v469 = vmax.f32 %v427, 0.0
      %v470 = vmax.f32 %v432, 0.0
      %v471 = vmax.f32 %v437, 0.0
      %v472 = vmax.f32 %v442, 0.0
      %v473 = vmax.f32 %v447, 0.0
      %v474 = vmax.f32 %v452, 0.0
      %v475 = vmax.f32 %v457, 0.0
      %v476 = vld [vmem:[%s4] sm:$0xff]
      %v477 = vld [vmem:[%s4 + $0x8] sm:$0xff]
      %v478 = vld [vmem:[%s4 + $0x10] sm:$0xff]
      %v479 = vld [vmem:[%s4 + $0x18] sm:$0xff]
      %v480 = vld [vmem:[%s5] sm:$0x1]
      %v482 = vlaneseq
      %v483 = vshrl.u32 %v482, 7
      %v484 = vsub.s32 0, %v483
      %v485 = vrot.slane %v480, %v484
      %v488 = vsel %vm266, %v460, 0
      %v491 = vsel %vm266, %v461, 0
      %v494 = vsel %vm266, %v462, 0
      %v497 = vsel %vm266, %v463, 0
      %v500 = vsel %vm266, %v464, 0
      %v503 = vsel %vm266, %v465, 0
      %v506 = vsel %vm266, %v466, 0
      %v509 = vsel %vm266, %v467, 0
      %v512 = vsel %vm266, %v468, 0
      %v515 = vsel %vm266, %v469, 0
      %v518 = vsel %vm266, %v470, 0
      %v521 = vsel %vm266, %v471, 0
      %v524 = vsel %vm266, %v472, 0
      %v527 = vsel %vm266, %v473, 0
      %v530 = vsel %vm266, %v474, 0
      %v533 = vsel %vm266, %v475, 0
      %535 = vmatprep.subr.mxu0 0.0
      %536 = vmatpush1.msra.mxu0 0.0
      %537 = vmatprep.subr.mxu0 0.0
      %538 = vmatpush1.msra.mxu0 0.0
      %539 = vmatprep.subr.mxu0 0.0
      %540 = vmatpush1.msra.mxu0 0.0
      %541 = vmatprep.subr.mxu0 0.0
      %542 = vmatpush1.msra.mxu0 0.0
      %543 = vmatprep.subr.mxu0 0.0
      %544 = vmatpush1.msra.mxu0 0.0
      %545 = vmatprep.subr.mxu0 0.0
      %546 = vmatpush1.msra.mxu0 0.0
      %547 = vmatprep.subr.mxu0 0.0
      %548 = vmatpush1.msra.mxu0 0.0
      %549 = vmatprep.subr.mxu0 0.0
      %550 = vmatpush1.msra.mxu0 0.0
      %551 = vmatprep.subr.mxu0 0.0
      %552 = vmatpush1.msra.mxu0 0.0
      %553 = vmatprep.subr.mxu0 0.0
      %554 = vmatpush1.msra.mxu0 0.0
      %555 = vmatprep.subr.mxu0 0.0
      %556 = vmatpush1.msra.mxu0 0.0
      %557 = vmatprep.subr.mxu0 0.0
      %558 = vmatpush1.msra.mxu0 0.0
      %559 = vmatprep.subr.mxu0 0.0
      %560 = vmatpush1.msra.mxu0 %v479
      %561 = vmatprep.subr.mxu0 0.0
      %562 = vmatpush1.msra.mxu0 %v478
      %563 = vmatprep.subr.mxu0 0.0
      %564 = vmatpush1.msra.mxu0 %v477
      %565 = vmatprep.subr.mxu0 0.0
      %566 = vmatpush1.msra.mxu0 %v476
      %567 = vmatprep.subr.mxu0 0.0
      %568 = vmatpush2.msra.mxu0 0.0
      %569 = vmatprep.subr.mxu0 0.0
      %570 = vmatpush2.msra.mxu0 0.0
      %571 = vmatprep.subr.mxu0 0.0
      %572 = vmatpush2.msra.mxu0 0.0
      %573 = vmatprep.subr.mxu0 0.0
      %574 = vmatpush2.msra.mxu0 0.0
      %575 = vmatprep.subr.mxu0 0.0
      %576 = vmatpush2.msra.mxu0 0.0
      %577 = vmatprep.subr.mxu0 0.0
      %578 = vmatpush2.msra.mxu0 0.0
      %579 = vmatprep.subr.mxu0 0.0
      %580 = vmatpush2.msra.mxu0 0.0
      %581 = vmatprep.subr.mxu0 0.0
      %582 = vmatpush2.msra.mxu0 0.0
      %583 = vmatprep.subr.mxu0 0.0
      %584 = vmatpush2.msra.mxu0 0.0
      %585 = vmatprep.subr.mxu0 0.0
      %586 = vmatpush2.msra.mxu0 0.0
      %587 = vmatprep.subr.mxu0 0.0
      %588 = vmatpush2.msra.mxu0 0.0
      %589 = vmatprep.subr.mxu0 0.0
      %590 = vmatpush2.msra.mxu0 0.0
      %591 = vmatprep.subr.mxu0 0.0
      %592 = vmatpush2.msra.mxu0 0.0
      %593 = vmatprep.subr.mxu0 0.0
      %594 = vmatpush2.msra.mxu0 0.0
      %595 = vmatprep.subr.mxu0 0.0
      %596 = vmatpush2.msra.mxu0 0.0
      %597 = vmatprep.subr.mxu0 0.0
      %598 = vmatpush2.msra.mxu0 0.0
      %599 = vmatprep.mubr.f32.mxu0 0.0
      %600 = vmatmul.mubr.f32.gmra.mxu0 %v488
      %v601 = vpop.f32.mrf.mxu0
      %v602 = vadd.f32 %v485, %v601
      %v603 = vpop.f32.mrf.mxu0
      %604 = vmatprep.mubr.f32.mxu0 0.0
      %605 = vmatmul.mubr.f32.gmra.mxu0 %v491
      %v606 = vpop.f32.mrf.mxu0
      %v607 = vadd.f32 %v485, %v606
      %v608 = vpop.f32.mrf.mxu0
      %609 = vmatprep.mubr.f32.mxu0 0.0
      %610 = vmatmul.mubr.f32.gmra.mxu0 %v494
      %v611 = vpop.f32.mrf.mxu0
      %v612 = vadd.f32 %v485, %v611
      %v613 = vpop.f32.mrf.mxu0
      %614 = vmatprep.mubr.f32.mxu0 0.0
      %615 = vmatmul.mubr.f32.gmra.mxu0 %v497
      %v616 = vpop.f32.mrf.mxu0
      %v617 = vadd.f32 %v485, %v616
      %v618 = vpop.f32.mrf.mxu0
      %619 = vmatprep.mubr.f32.mxu0 0.0
      %620 = vmatmul.mubr.f32.gmra.mxu0 %v500
      %v621 = vpop.f32.mrf.mxu0
      %v622 = vadd.f32 %v485, %v621
      %v623 = vpop.f32.mrf.mxu0
      %624 = vmatprep.mubr.f32.mxu0 0.0
      %625 = vmatmul.mubr.f32.gmra.mxu0 %v503
      %v626 = vpop.f32.mrf.mxu0
      %v627 = vadd.f32 %v485, %v626
      %v628 = vpop.f32.mrf.mxu0
      %629 = vmatprep.mubr.f32.mxu0 0.0
      %630 = vmatmul.mubr.f32.gmra.mxu0 %v506
      %v631 = vpop.f32.mrf.mxu0
      %v632 = vadd.f32 %v485, %v631
      %v633 = vpop.f32.mrf.mxu0
      %634 = vmatprep.mubr.f32.mxu0 0.0
      %635 = vmatmul.mubr.f32.gmra.mxu0 %v509
      %v636 = vpop.f32.mrf.mxu0
      %v637 = vadd.f32 %v485, %v636
      %v638 = vpop.f32.mrf.mxu0
      %639 = vmatprep.mubr.f32.mxu0 0.0
      %640 = vmatmul.mubr.f32.gmra.mxu0 %v512
      %v641 = vpop.f32.mrf.mxu0
      %v642 = vadd.f32 %v485, %v641
      %v643 = vpop.f32.mrf.mxu0
      %644 = vmatprep.mubr.f32.mxu0 0.0
      %645 = vmatmul.mubr.f32.gmra.mxu0 %v515
      %v646 = vpop.f32.mrf.mxu0
      %v647 = vadd.f32 %v485, %v646
      %v648 = vpop.f32.mrf.mxu0
      %649 = vmatprep.mubr.f32.mxu0 0.0
      %650 = vmatmul.mubr.f32.gmra.mxu0 %v518
      %v651 = vpop.f32.mrf.mxu0
      %v652 = vadd.f32 %v485, %v651
      %v653 = vpop.f32.mrf.mxu0
      %654 = vmatprep.mubr.f32.mxu0 0.0
      %655 = vmatmul.mubr.f32.gmra.mxu0 %v521
      %v656 = vpop.f32.mrf.mxu0
      %v657 = vadd.f32 %v485, %v656
      %v658 = vpop.f32.mrf.mxu0
      %659 = vmatprep.mubr.f32.mxu0 0.0
      %660 = vmatmul.mubr.f32.gmra.mxu0 %v524
      %v661 = vpop.f32.mrf.mxu0
      %v662 = vadd.f32 %v485, %v661
      %v663 = vpop.f32.mrf.mxu0
      %664 = vmatprep.mubr.f32.mxu0 0.0
      %665 = vmatmul.mubr.f32.gmra.mxu0 %v527
      %v666 = vpop.f32.mrf.mxu0
      %v667 = vadd.f32 %v485, %v666
      %v668 = vpop.f32.mrf.mxu0
      %669 = vmatprep.mubr.f32.mxu0 0.0
      %670 = vmatmul.mubr.f32.gmra.mxu0 %v530
      %v671 = vpop.f32.mrf.mxu0
      %v672 = vadd.f32 %v485, %v671
      %v673 = vpop.f32.mrf.mxu0
      %674 = vmatprep.mubr.f32.mxu0 0.0
      %675 = vmatmul.mubr.f32.gmra.mxu0 %v533
      %v676 = vpop.f32.mrf.mxu0
      %v677 = vadd.f32 %v485, %v676
      %v678 = vpop.f32.mrf.mxu0
      %679 = vdwg.mxu0
      %vm680 = vcmask 130048
      %681 = vst.msk [vmem:[%s233] sm:$0xff] %vm680, %v602
      %682 = vst.msk [vmem:[%s233 + $0x8] sm:$0xff] %vm680, %v607
      %683 = vst.msk [vmem:[%s233 + $0x10] sm:$0xff] %vm680, %v612
      %684 = vst.msk [vmem:[%s233 + $0x18] sm:$0xff] %vm680, %v617
      %685 = vst.msk [vmem:[%s233 + $0x20] sm:$0xff] %vm680, %v622
      %686 = vst.msk [vmem:[%s233 + $0x28] sm:$0xff] %vm680, %v627
      %687 = vst.msk [vmem:[%s233 + $0x30] sm:$0xff] %vm680, %v632
      %688 = vst.msk [vmem:[%s233 + $0x38] sm:$0xff] %vm680, %v637
      %689 = vst.msk [vmem:[%s233 + $0x40] sm:$0xff] %vm680, %v642
      %690 = vst.msk [vmem:[%s233 + $0x48] sm:$0xff] %vm680, %v647
      %691 = vst.msk [vmem:[%s233 + $0x50] sm:$0xff] %vm680, %v652
      %692 = vst.msk [vmem:[%s233 + $0x58] sm:$0xff] %vm680, %v657
      %693 = vst.msk [vmem:[%s233 + $0x60] sm:$0xff] %vm680, %v662
      %694 = vst.msk [vmem:[%s233 + $0x68] sm:$0xff] %vm680, %v667
      %695 = vst.msk [vmem:[%s233 + $0x70] sm:$0xff] %vm680, %v672
      %696 = vst.msk [vmem:[%s233 + $0x78] sm:$0xff] %vm680, %v677
      %s697 = smul.u32 16, %s23
      %p698 = scmp.lt.s32.totalorder %s697, 111
      %s699 = scalar_select %p698, %s697, 111
      %s700 = smul.addr %s699, 8
      %s701 = scalar_lea.vmem %s6, %s700
      // Predicated region
      $region41: #{_forward_grouped.1} parent=39 // pred_check
        %p702 = pneg %p151
      $region42: #{_forward_grouped.1} parent=39 // pred_check_branch
        %704 = sbr.rel (%p702) target = $region44
      $region43: #{_forward_grouped.1} parent=39 // pred_region
        %s705 = smul.u32 16, %s23
      $region44: #{_forward_grouped.1} parent=39 // pred_fallthru
        _
    $region40: #{_forward_grouped.1} parent=5 // pred_fallthru
      _
    %p706 = scmp.le.s32.totalorder 2, %s18
    // Predicated region
    $region45: #{_forward_grouped.1} parent=5 // pred_check
      %p707 = pneg %p706
    $region46: #{_forward_grouped.1} parent=5 // pred_check_branch
      %709 = sbr.rel (%p707) target = $region48
    $region47: #{_forward_grouped.1} parent=5 // pred_region
      %s710 = ssub.s32 %s18, 2
      // Predicated region
      $region49: #{_forward_grouped.1} parent=47 // pred_check
        %p711 = pneg %p157
      $region50: #{_forward_grouped.1} parent=47 // pred_check_branch
        %713 = sbr.rel (%p711) target = $region52
      $region51: #{_forward_grouped.1} parent=47 // pred_region
        %s714 = smul.u32 16, %s24
        %p715 = scmp.lt.s32.totalorder %s714, 111
        %s716 = scalar_select %p715, %s714, 111
        %s717 = smul.addr %s716, 8
        %s718 = scalar_lea.vmem %s6, %s717
      $region52: #{_forward_grouped.1} parent=47 // pred_fallthru
        _
    $region48: #{_forward_grouped.1} parent=5 // pred_fallthru
      _
  $region6: #{_forward_grouped.1} parent=0 // loop_footer
    %s22 = sadd.s32 1, %s18
  $region7: #{_forward_grouped.1} parent=0 // loop_footer_branch
    %17 = sbr.rel target = $region3
  $region8: #{_forward_grouped.1} parent=0 // loop_exit
    _

</llo_original>
